<compile_context>
chip_gen: v7x
topology: tpu7x:2x2x1
jax: 0.10.0
libtpu: 0.0.40
codegen_flags: <defaults>
</compile_context>

<pallas_src>
import functools

import jax
import jax.numpy as jnp
import numpy as np
from jax.experimental import pallas as pl
from jax.experimental.pallas import tpu as pltpu

JOINT_NUM = 15                   # Config.joint_num_upper (implied by 14*6 slice)
N_JOINTS = JOINT_NUM - 1         # 14
OUT_F = N_JOINTS * 6 + 3         # 87
FEAT = 128


def _round_up(a, b):
    return ((a + b - 1) // b) * b


# --------------------------------------------------------------------------
# Fused kernel: fc1 -> ReLU -> fc2 -> Gram-Schmidt epilogue
#
# fc2 weights are permuted so the fc2 output columns are component-major:
#   [ 0: 14) = a0 (q6[:,0] for joints 0..13)   [42: 56) = b0 (q6[:,3])
#   [14: 28) = a1                              [56: 70) = b1
#   [28: 42) = a2                              [70: 84) = b2
#   [84: 87) = head, [87:128) = zero pad
# Rotation output column groups (14 wide each): g = 3*i + k, i = matrix row
# (component), k in {0:x, 1:y, 2:z}; cols 126..127 zero pad.
# --------------------------------------------------------------------------
def mlp_head_kernel(g_ref, w1_ref, bias1_ref, w2_ref, bias2_ref, rot_ref, head_ref):
    g = g_ref[...]
    h = jnp.dot(g, w1_ref[...], preferred_element_type=jnp.float32) + bias1_ref[...]
    h = jnp.maximum(h, 0.0)
    x = jnp.dot(h, w2_ref[...], preferred_element_type=jnp.float32) + bias2_ref[...]

    a0 = x[:, 0:14]
    a1 = x[:, 14:28]
    a2 = x[:, 28:42]
    b0 = x[:, 42:56]
    b1 = x[:, 56:70]
    b2 = x[:, 70:84]

    # torch F.normalize(eps=1e-12): v / max(||v||, eps) == v * rsqrt(max(s, eps^2))
    eps2 = 1e-24
    inv_a = jax.lax.rsqrt(jnp.maximum(a0 * a0 + a1 * a1 + a2 * a2, eps2))
    x0 = a0 * inv_a
    x1 = a1 * inv_a
    x2 = a2 * inv_a

    # z = normalize(cross(x, b))
    c0 = x1 * b2 - x2 * b1
    c1 = x2 * b0 - x0 * b2
    c2 = x0 * b1 - x1 * b0
    inv_c = jax.lax.rsqrt(jnp.maximum(c0 * c0 + c1 * c1 + c2 * c2, eps2))
    z0 = c0 * inv_c
    z1 = c1 * inv_c
    z2 = c2 * inv_c

    # y = cross(z, x)
    y0 = z1 * x2 - z2 * x1
    y1 = z2 * x0 - z0 * x2
    y2 = z0 * x1 - z1 * x0

    pad = jnp.zeros((x0.shape[0], 2), jnp.float32)
    rot_ref[...] = jnp.concatenate(
        [x0, y0, z0, x1, y1, z1, x2, y2, z2, pad], axis=-1
    ).astype(rot_ref.dtype)
    head_ref[...] = x[:, 84:92].astype(head_ref.dtype)  # cols 87..91 are zero pad


# --------------------------------------------------------------------------
# Wrapper (parameter plumbing / layout glue only)
# --------------------------------------------------------------------------
def init_params(key):
    """Deterministic init mimicking nn.Linear defaults (uniform +/- 1/sqrt(fan_in))."""
    k1, k2, k3, k4 = jax.random.split(key, 4)
    bound = 1.0 / np.sqrt(128.0)
    w1 = jax.random.uniform(k1, (FEAT, FEAT), jnp.float32, -bound, bound)   # (out, in)
    b1 = jax.random.uniform(k2, (FEAT,), jnp.float32, -bound, bound)
    w2 = jax.random.uniform(k3, (OUT_F, FEAT), jnp.float32, -bound, bound)
    b2 = jax.random.uniform(k4, (OUT_F,), jnp.float32, -bound, bound)
    return {"w1": w1, "b1": b1, "w2": w2, "b2": b2}


def _permuted_fc2(params):
    # component-major permutation of the fc2 output features (see kernel docstring)
    perm = np.concatenate(
        [np.arange(c, 6 * N_JOINTS, 6) for c in range(6)]
        + [np.arange(6 * N_JOINTS, OUT_F)]
    )
    w2t = jnp.take(params["w2"].T, perm, axis=1)          # (128, 87)
    b2 = jnp.take(params["b2"], perm, axis=0)             # (87,)
    w2t_pad = jnp.zeros((FEAT, FEAT), jnp.float32).at[:, :OUT_F].set(w2t)
    b2_pad = jnp.zeros((1, FEAT), jnp.float32).at[:, :OUT_F].set(b2)
    return w2t_pad, b2_pad


@functools.partial(jax.jit, static_argnames=("batch_size", "length_size"))
def mlp_head_forward(g_vec, params, batch_size, length_size):
    B, L = batch_size, length_size
    assert g_vec.shape == (B, L, FEAT)
    n = B * L
    g_flat = g_vec.reshape(n, FEAT)

    w1t = params["w1"].T                                   # kernel computes x @ W^T
    bias1 = params["b1"].reshape(1, FEAT)
    w2t_pad, bias2 = _permuted_fc2(params)

    # Large row tile (multiple of 8); no wrapper-side zero-pad copy of g.
    # Pallas masks the partial last block when tm does not divide n.
    # NOTE: bf16 matmuls (with f32 accumulation) would halve HBM traffic, but
    # Gram-Schmidt amplifies fc2 error, so f32 is kept for tight tolerances.
    tm = min(512, _round_up(n, 8))
    grid = (pl.cdiv(n, tm),)

    rot_out, head_out = pl.pallas_call(
        mlp_head_kernel,
        out_shape=(
            jax.ShapeDtypeStruct((n, FEAT), jnp.float32),   # rotation comps (126 used)
            jax.ShapeDtypeStruct((n, 8), jnp.float32),      # head (3 used)
        ),
        grid=grid,
        in_specs=[
            pl.BlockSpec((tm, FEAT), lambda i: (i, 0)),     # g rows
            pl.BlockSpec((FEAT, FEAT), lambda i: (0, 0)),   # w1^T
            pl.BlockSpec((1, FEAT), lambda i: (0, 0)),      # b1
            pl.BlockSpec((FEAT, FEAT), lambda i: (0, 0)),   # permuted/padded w2^T
            pl.BlockSpec((1, FEAT), lambda i: (0, 0)),      # permuted/padded b2
        ],
        out_specs=(
            pl.BlockSpec((tm, FEAT), lambda i: (i, 0)),
            pl.BlockSpec((tm, 8), lambda i: (i, 0)),
        ),
        compiler_params=pltpu.CompilerParams(
            dimension_semantics=("parallel",),              # megacore-shardable rows
            vmem_limit_bytes=32 * 1024 * 1024,              # explicit: safe on v5e/v6e/v7x
        ),
    )(g_flat, w1t, bias1, w2t_pad, bias2)

    # column group g = 3*i + k  ->  q[..., i, k]  (k: 0=x, 1=y, 2=z columns)
    rot = rot_out[:, : 9 * N_JOINTS].reshape(B, L, 9, N_JOINTS)
    q = jnp.transpose(rot, (0, 1, 3, 2)).reshape(B, L, N_JOINTS, 3, 3)
    head = head_out[:, :3].reshape(B, L, 3)
    return q, head


# --------------------------------------------------------------------------
# Pure-JAX reference (correctness check only)
# --------------------------------------------------------------------------
def reference_forward(g_vec, params, B, L):
    x = jnp.maximum(g_vec @ params["w1"].T + params["b1"], 0.0)
    x = x @ params["w2"].T + params["b2"]
    q6 = x[:, :, : N_JOINTS * 6].reshape(B * L * N_JOINTS, 6)

    def norm(v):
        return v / jnp.maximum(jnp.linalg.norm(v, axis=-1, keepdims=True), 1e-12)

    tx = norm(q6[:, :3])
    tz = norm(jnp.cross(tx, q6[:, 3:]))
    ty = jnp.cross(tz, tx)
    q = jnp.concatenate(
        [tx.reshape(B, L, N_JOINTS, 3, 1),
         ty.reshape(B, L, N_JOINTS, 3, 1),
         tz.reshape(B, L, N_JOINTS, 3, 1)],
        axis=-1,
    )
    return q, x[:, :, -3:]


if __name__ == "__main__":
    key = jax.random.PRNGKey(0)
    k_in, k_par = jax.random.split(key)

    B, L = 2, 8
    g_vec = jax.random.normal(k_in, (B, L, FEAT), jnp.float32)
    params = init_params(k_par)

    q, head = mlp_head_forward(g_vec, params, batch_size=B, length_size=L)
    q = jax.block_until_ready(q)
    head = jax.block_until_ready(head)

    q_ref, head_ref = reference_forward(g_vec, params, B, L)
    np.testing.assert_allclose(np.asarray(q), np.asarray(q_ref), rtol=1e-4, atol=1e-4)
    np.testing.assert_allclose(np.asarray(head), np.asarray(head_ref), rtol=1e-4, atol=1e-4)

    assert q.shape == (B, L, N_JOINTS, 3, 3) and head.shape == (B, L, 3)
    print("KERNEL_OK")
</pallas_src>

<mosaic_0001>
module attributes {stable_mosaic.version = 11 : i64} {
  func.func @mlp_head_kernel(%arg0: i32, %arg1: memref<16x128xf32, #tpu.memory_space<vmem>>, %arg2: memref<128x128xf32, #tpu.memory_space<vmem>>, %arg3: memref<1x128xf32, #tpu.memory_space<vmem>>, %arg4: memref<128x128xf32, #tpu.memory_space<vmem>>, %arg5: memref<1x128xf32, #tpu.memory_space<vmem>>, %arg6: memref<16x128xf32, #tpu.memory_space<vmem>>, %arg7: memref<16x8xf32, #tpu.memory_space<vmem>>) attributes {dimension_semantics = [#tpu.dimension_semantics<parallel>], iteration_bounds = array<i64: 1>, scalar_prefetch = 0 : i64, scratch_operands = 0 : i64, tpu.core_type = #tpu.core_type<tc>, window_params = [{transform_indices = @transform_0, window_bounds = array<i64: 16, 128>}, {pipeline_mode = #tpu.pipeline_mode<synchronous>, transform_indices = @transform_1, window_bounds = array<i64: 128, 128>}, {pipeline_mode = #tpu.pipeline_mode<synchronous>, transform_indices = @transform_2, window_bounds = array<i64: 1, 128>}, {pipeline_mode = #tpu.pipeline_mode<synchronous>, transform_indices = @transform_3, window_bounds = array<i64: 128, 128>}, {pipeline_mode = #tpu.pipeline_mode<synchronous>, transform_indices = @transform_4, window_bounds = array<i64: 1, 128>}, {transform_indices = @transform_5, window_bounds = array<i64: 16, 128>}, {transform_indices = @transform_6, window_bounds = array<i64: 16, 8>}]} {
    %c0 = arith.constant 0 : index
    %c0_0 = arith.constant 0 : index
    %0 = vector.load %arg1[%c0, %c0_0] : memref<16x128xf32, #tpu.memory_space<vmem>>, vector<16x128xf32>
    %c0_1 = arith.constant 0 : index
    %c0_2 = arith.constant 0 : index
    %1 = vector.load %arg2[%c0_1, %c0_2] : memref<128x128xf32, #tpu.memory_space<vmem>>, vector<128x128xf32>
    %cst = arith.constant dense<0.000000e+00> : vector<16x128xf32>
    %2 = tpu.matmul %0, %1, %cst {dimension_numbers = #tpu.dot_dimension_numbers<[1], [0], [0], [1], [0, 0, 1, 1], [], []>} : vector<16x128xf32>, vector<128x128xf32>, vector<16x128xf32> -> vector<16x128xf32>
    %c0_3 = arith.constant 0 : index
    %c0_4 = arith.constant 0 : index
    %3 = vector.load %arg3[%c0_3, %c0_4] : memref<1x128xf32, #tpu.memory_space<vmem>>, vector<1x128xf32>
    %4 = vector.broadcast %3 : vector<1x128xf32> to vector<16x128xf32>
    %5 = arith.addf %2, %4 : vector<16x128xf32>
    %cst_5 = arith.constant 0.000000e+00 : f32
    %6 = vector.broadcast %cst_5 : f32 to vector<16x128xf32>
    %7 = arith.maximumf %5, %6 : vector<16x128xf32>
    %c0_6 = arith.constant 0 : index
    %c0_7 = arith.constant 0 : index
    %8 = vector.load %arg4[%c0_6, %c0_7] : memref<128x128xf32, #tpu.memory_space<vmem>>, vector<128x128xf32>
    %cst_8 = arith.constant dense<0.000000e+00> : vector<16x128xf32>
    %9 = tpu.matmul %7, %8, %cst_8 {dimension_numbers = #tpu.dot_dimension_numbers<[1], [0], [0], [1], [0, 0, 1, 1], [], []>} : vector<16x128xf32>, vector<128x128xf32>, vector<16x128xf32> -> vector<16x128xf32>
    %c0_9 = arith.constant 0 : index
    %c0_10 = arith.constant 0 : index
    %10 = vector.load %arg5[%c0_9, %c0_10] : memref<1x128xf32, #tpu.memory_space<vmem>>, vector<1x128xf32>
    %11 = vector.broadcast %10 : vector<1x128xf32> to vector<16x128xf32>
    %12 = arith.addf %9, %11 : vector<16x128xf32>
    %13 = vector.extract_strided_slice %12 {offsets = [0, 0], sizes = [16, 14], strides = [1, 1]} : vector<16x128xf32> to vector<16x14xf32>
    %14 = vector.extract_strided_slice %12 {offsets = [0, 14], sizes = [16, 14], strides = [1, 1]} : vector<16x128xf32> to vector<16x14xf32>
    %15 = vector.extract_strided_slice %12 {offsets = [0, 28], sizes = [16, 14], strides = [1, 1]} : vector<16x128xf32> to vector<16x14xf32>
    %16 = vector.extract_strided_slice %12 {offsets = [0, 42], sizes = [16, 14], strides = [1, 1]} : vector<16x128xf32> to vector<16x14xf32>
    %17 = vector.extract_strided_slice %12 {offsets = [0, 56], sizes = [16, 14], strides = [1, 1]} : vector<16x128xf32> to vector<16x14xf32>
    %18 = vector.extract_strided_slice %12 {offsets = [0, 70], sizes = [16, 14], strides = [1, 1]} : vector<16x128xf32> to vector<16x14xf32>
    %19 = arith.mulf %13, %13 : vector<16x14xf32>
    %20 = arith.mulf %14, %14 : vector<16x14xf32>
    %21 = arith.addf %19, %20 : vector<16x14xf32>
    %22 = arith.mulf %15, %15 : vector<16x14xf32>
    %23 = arith.addf %21, %22 : vector<16x14xf32>
    %cst_11 = arith.constant 1.000000e-24 : f32
    %24 = vector.broadcast %cst_11 : f32 to vector<16x14xf32>
    %25 = arith.maximumf %23, %24 : vector<16x14xf32>
    %26 = math.rsqrt %25 : vector<16x14xf32>
    %27 = arith.mulf %13, %26 : vector<16x14xf32>
    %28 = arith.mulf %14, %26 : vector<16x14xf32>
    %29 = arith.mulf %15, %26 : vector<16x14xf32>
    %30 = arith.mulf %28, %18 : vector<16x14xf32>
    %31 = arith.mulf %29, %17 : vector<16x14xf32>
    %32 = arith.subf %30, %31 : vector<16x14xf32>
    %33 = arith.mulf %29, %16 : vector<16x14xf32>
    %34 = arith.mulf %27, %18 : vector<16x14xf32>
    %35 = arith.subf %33, %34 : vector<16x14xf32>
    %36 = arith.mulf %27, %17 : vector<16x14xf32>
    %37 = arith.mulf %28, %16 : vector<16x14xf32>
    %38 = arith.subf %36, %37 : vector<16x14xf32>
    %39 = arith.mulf %32, %32 : vector<16x14xf32>
    %40 = arith.mulf %35, %35 : vector<16x14xf32>
    %41 = arith.addf %39, %40 : vector<16x14xf32>
    %42 = arith.mulf %38, %38 : vector<16x14xf32>
    %43 = arith.addf %41, %42 : vector<16x14xf32>
    %cst_12 = arith.constant 1.000000e-24 : f32
    %44 = vector.broadcast %cst_12 : f32 to vector<16x14xf32>
    %45 = arith.maximumf %43, %44 : vector<16x14xf32>
    %46 = math.rsqrt %45 : vector<16x14xf32>
    %47 = arith.mulf %32, %46 : vector<16x14xf32>
    %48 = arith.mulf %35, %46 : vector<16x14xf32>
    %49 = arith.mulf %38, %46 : vector<16x14xf32>
    %50 = arith.mulf %48, %29 : vector<16x14xf32>
    %51 = arith.mulf %49, %28 : vector<16x14xf32>
    %52 = arith.subf %50, %51 : vector<16x14xf32>
    %53 = arith.mulf %49, %27 : vector<16x14xf32>
    %54 = arith.mulf %47, %29 : vector<16x14xf32>
    %55 = arith.subf %53, %54 : vector<16x14xf32>
    %56 = arith.mulf %47, %28 : vector<16x14xf32>
    %57 = arith.mulf %48, %27 : vector<16x14xf32>
    %58 = arith.subf %56, %57 : vector<16x14xf32>
    %cst_13 = arith.constant 0.000000e+00 : f32
    %59 = vector.broadcast %cst_13 : f32 to vector<16x2xf32>
    %60 = tpu.concatenate %27, %52, %47, %28, %55, %48, %29, %58, %49, %59 in 1 : vector<16x14xf32>, vector<16x14xf32>, vector<16x14xf32>, vector<16x14xf32>, vector<16x14xf32>, vector<16x14xf32>, vector<16x14xf32>, vector<16x14xf32>, vector<16x14xf32>, vector<16x2xf32> -> vector<16x128xf32>
    %c0_14 = arith.constant 0 : index
    %c0_15 = arith.constant 0 : index
    %61 = vector.load %arg6[%c0_14, %c0_15] : memref<16x128xf32, #tpu.memory_space<vmem>>, vector<16x128xf32>
    tpu.vector_store %arg6[%c0_14, %c0_15], %60 {strides = array<i32>} : memref<16x128xf32, #tpu.memory_space<vmem>>, vector<16x128xf32>,
    %62 = vector.extract_strided_slice %12 {offsets = [0, 84], sizes = [16, 8], strides = [1, 1]} : vector<16x128xf32> to vector<16x8xf32>
    %c0_16 = arith.constant 0 : index
    %c0_17 = arith.constant 0 : index
    %63 = vector.load %arg7[%c0_16, %c0_17] : memref<16x8xf32, #tpu.memory_space<vmem>>, vector<16x8xf32>
    tpu.vector_store %arg7[%c0_16, %c0_17], %62 {strides = array<i32>} : memref<16x8xf32, #tpu.memory_space<vmem>>, vector<16x8xf32>,
    return
  }
  func.func @transform_0(%arg0: i32) -> (i32, i32) {
    %c0_i32 = arith.constant 0 : i32
    %c0_i32_0 = arith.constant 0 : i32
    return %arg0, %c0_i32 : i32, i32
  }
  func.func @transform_1(%arg0: i32) -> (i32, i32) {
    %c0_i32 = arith.constant 0 : i32
    %c0_i32_0 = arith.constant 0 : i32
    %c0_i32_1 = arith.constant 0 : i32
    return %c0_i32, %c0_i32_0 : i32, i32
  }
  func.func @transform_2(%arg0: i32) -> (i32, i32) {
    %c0_i32 = arith.constant 0 : i32
    %c0_i32_0 = arith.constant 0 : i32
    %c0_i32_1 = arith.constant 0 : i32
    return %c0_i32, %c0_i32_0 : i32, i32
  }
  func.func @transform_3(%arg0: i32) -> (i32, i32) {
    %c0_i32 = arith.constant 0 : i32
    %c0_i32_0 = arith.constant 0 : i32
    %c0_i32_1 = arith.constant 0 : i32
    return %c0_i32, %c0_i32_0 : i32, i32
  }
  func.func @transform_4(%arg0: i32) -> (i32, i32) {
    %c0_i32 = arith.constant 0 : i32
    %c0_i32_0 = arith.constant 0 : i32
    %c0_i32_1 = arith.constant 0 : i32
    return %c0_i32, %c0_i32_0 : i32, i32
  }
  func.func @transform_5(%arg0: i32) -> (i32, i32) {
    %c0_i32 = arith.constant 0 : i32
    %c0_i32_0 = arith.constant 0 : i32
    return %arg0, %c0_i32 : i32, i32
  }
  func.func @transform_6(%arg0: i32) -> (i32, i32) {
    %c0_i32 = arith.constant 0 : i32
    %c0_i32_0 = arith.constant 0 : i32
    return %arg0, %c0_i32 : i32, i32
  }
}

</mosaic_0001>

<llo_original>
// kernel: mlp_head_forward.1
$region0: #{mlp_head_forward.1}
  #allocation0 [shape = 'u32[]', space=smem, size = 0x4, offset = 0x4, fixed_abs, tag = 'smem constant byte address 0x4 - core index']
  #allocation1 [shape = 'u32[144,128]{1,0:T(1,128)}', space=vmem, size = 0x12000, scoped, tag = 'internal scratch']
  %s0 = inlined_call_operand.vmem [shape: f32[16,128], index: 0, kind: input, shape index: {}]
  %s1 = inlined_call_operand.vmem [shape: f32[128,128], index: 1, kind: input, shape index: {}]
  %s2 = inlined_call_operand.vmem [shape: f32[1,128], index: 2, kind: input, shape index: {}]
  %s3 = inlined_call_operand.vmem [shape: f32[128,128], index: 3, kind: input, shape index: {}]
  %s4 = inlined_call_operand.vmem [shape: f32[1,128], index: 4, kind: input, shape index: {}]
  %s5 = inlined_call_operand.vmem [shape: f32[16,128], index: 5, kind: output, shape index: {0}]
  %s6 = inlined_call_operand.vmem [shape: f32[16,8], index: 6, kind: output, shape index: {1}]
  %7 = xla_tuple %s5, %s6
  %s8 = sld [smem:[#allocation0]]
  $region38: #{mlp_head_forward.1} parent=0
    _
  %s10 = ssub.s32 1, %s8
  %s11 = scalar_select 0, %s10, %s8
  // Predicated region
  $region2: #{mlp_head_forward.1} parent=0 // pred_check
    _
  $region3: #{mlp_head_forward.1} parent=0 // pred_check_branch
    %13 = sbr.rel (0) target = $region5
  $region4: #{mlp_head_forward.1} parent=0 // pred_region
    _
  $region5: #{mlp_head_forward.1} parent=0 // pred_fallthru
    _
  // Predicated region
  $region6: #{mlp_head_forward.1} parent=0 // pred_check
    _
  $region7: #{mlp_head_forward.1} parent=0 // pred_check_branch
    %15 = sbr.rel (0) target = $region9
  $region8: #{mlp_head_forward.1} parent=0 // pred_region
    _
  $region9: #{mlp_head_forward.1} parent=0 // pred_fallthru
    _
  // Predicated region
  $region10: #{mlp_head_forward.1} parent=0 // pred_check
    _
  $region11: #{mlp_head_forward.1} parent=0 // pred_check_branch
    %17 = sbr.rel (0) target = $region13
  $region12: #{mlp_head_forward.1} parent=0 // pred_region
    _
  $region13: #{mlp_head_forward.1} parent=0 // pred_fallthru
    _
  // Predicated region
  $region14: #{mlp_head_forward.1} parent=0 // pred_check
    _
  $region15: #{mlp_head_forward.1} parent=0 // pred_check_branch
    %19 = sbr.rel (0) target = $region17
  $region16: #{mlp_head_forward.1} parent=0 // pred_region
    _
  $region17: #{mlp_head_forward.1} parent=0 // pred_fallthru
    _
  // Predicated region
  $region18: #{mlp_head_forward.1} parent=0 // pred_check
    _
  $region19: #{mlp_head_forward.1} parent=0 // pred_check_branch
    %21 = sbr.rel (0) target = $region21
  $region20: #{mlp_head_forward.1} parent=0 // pred_region
    _
  $region21: #{mlp_head_forward.1} parent=0 // pred_fallthru
    _
  %v22 = vld [vmem:[%s0] sm:$0xff]
  %v23 = vld [vmem:[%s0 + $0x8] sm:$0xff]
  %v24 = vld [vmem:[%s1] sm:$0xff]
  %v25 = vld [vmem:[%s1 + $0x8] sm:$0xff]
  %v26 = vld [vmem:[%s1 + $0x10] sm:$0xff]
  %v27 = vld [vmem:[%s1 + $0x18] sm:$0xff]
  %v28 = vld [vmem:[%s1 + $0x20] sm:$0xff]
  %v29 = vld [vmem:[%s1 + $0x28] sm:$0xff]
  %v30 = vld [vmem:[%s1 + $0x30] sm:$0xff]
  %v31 = vld [vmem:[%s1 + $0x38] sm:$0xff]
  %v32 = vld [vmem:[%s1 + $0x40] sm:$0xff]
  %v33 = vld [vmem:[%s1 + $0x48] sm:$0xff]
  %v34 = vld [vmem:[%s1 + $0x50] sm:$0xff]
  %v35 = vld [vmem:[%s1 + $0x58] sm:$0xff]
  %v36 = vld [vmem:[%s1 + $0x60] sm:$0xff]
  %v37 = vld [vmem:[%s1 + $0x68] sm:$0xff]
  %v38 = vld [vmem:[%s1 + $0x70] sm:$0xff]
  %v39 = vld [vmem:[%s1 + $0x78] sm:$0xff]
  %v40 = vld [vmem:[%s2] sm:$0x1]
  %v42 = vlaneseq
  %v43 = vshrl.u32 %v42, 7
  %v44 = vsub.s32 0, %v43
  %v45 = vrot.slane %v40, %v44
  %47 = vmatprep.subr.mxu0 0.0
  %48 = vmatpush1.msra.mxu0 %v24
  %49 = vmatprep.subr.mxu0 0.0
  %50 = vmatpush1.msra.mxu0 %v25
  %51 = vmatprep.subr.mxu0 0.0
  %52 = vmatpush1.msra.mxu0 %v26
  %53 = vmatprep.subr.mxu0 0.0
  %54 = vmatpush1.msra.mxu0 %v27
  %55 = vmatprep.subr.mxu0 0.0
  %56 = vmatpush1.msra.mxu0 %v28
  %57 = vmatprep.subr.mxu0 0.0
  %58 = vmatpush1.msra.mxu0 %v29
  %59 = vmatprep.subr.mxu0 0.0
  %60 = vmatpush1.msra.mxu0 %v30
  %61 = vmatprep.subr.mxu0 0.0
  %62 = vmatpush1.msra.mxu0 %v31
  %63 = vmatprep.subr.mxu0 0.0
  %64 = vmatpush1.msra.mxu0 %v32
  %65 = vmatprep.subr.mxu0 0.0
  %66 = vmatpush1.msra.mxu0 %v33
  %67 = vmatprep.subr.mxu0 0.0
  %68 = vmatpush1.msra.mxu0 %v34
  %69 = vmatprep.subr.mxu0 0.0
  %70 = vmatpush1.msra.mxu0 %v35
  %71 = vmatprep.subr.mxu0 0.0
  %72 = vmatpush1.msra.mxu0 %v36
  %73 = vmatprep.subr.mxu0 0.0
  %74 = vmatpush1.msra.mxu0 %v37
  %75 = vmatprep.subr.mxu0 0.0
  %76 = vmatpush1.msra.mxu0 %v38
  %77 = vmatprep.subr.mxu0 0.0
  %78 = vmatpush1.msra.mxu0 %v39
  %79 = vmatprep.subr.mxu0 0.0
  %80 = vmatpush1.msra.mxu0 0.0
  %81 = vmatprep.subr.mxu0 0.0
  %82 = vmatpush1.msra.mxu0 0.0
  %83 = vmatprep.subr.mxu0 0.0
  %84 = vmatpush1.msra.mxu0 0.0
  %85 = vmatprep.subr.mxu0 0.0
  %86 = vmatpush1.msra.mxu0 0.0
  %87 = vmatprep.subr.mxu0 0.0
  %88 = vmatpush1.msra.mxu0 0.0
  %89 = vmatprep.subr.mxu0 0.0
  %90 = vmatpush1.msra.mxu0 0.0
  %91 = vmatprep.subr.mxu0 0.0
  %92 = vmatpush1.msra.mxu0 0.0
  %93 = vmatprep.subr.mxu0 0.0
  %94 = vmatpush1.msra.mxu0 0.0
  %95 = vmatprep.subr.mxu0 0.0
  %96 = vmatpush1.msra.mxu0 0.0
  %97 = vmatprep.subr.mxu0 0.0
  %98 = vmatpush1.msra.mxu0 0.0
  %99 = vmatprep.subr.mxu0 0.0
  %100 = vmatpush1.msra.mxu0 0.0
  %101 = vmatprep.subr.mxu0 0.0
  %102 = vmatpush1.msra.mxu0 0.0
  %103 = vmatprep.subr.mxu0 0.0
  %104 = vmatpush1.msra.mxu0 0.0
  %105 = vmatprep.subr.mxu0 0.0
  %106 = vmatpush1.msra.mxu0 0.0
  %107 = vmatprep.subr.mxu0 0.0
  %108 = vmatpush1.msra.mxu0 0.0
  %109 = vmatprep.subr.mxu0 0.0
  %110 = vmatpush1.msra.mxu0 0.0
  %111 = vmatprep.mubr.f32.mxu0 0.0
  %112 = vmatmul.mubr.f32.gmra.mrb[0].mxu0 %v22
  %v113 = vpop.f32.mrb[0].mxu0
  %v114 = vadd.f32 %v45, %v113
  %v115 = vpop.f32.mrb[0].mxu0
  %116 = vmatprep.mubr.f32.mxu0 0.0
  %117 = vmatmul.mubr.f32.gmra.mrb[0].mxu0 %v23
  %v118 = vpop.f32.mrb[0].mxu0
  %v119 = vadd.f32 %v45, %v118
  %v120 = vpop.f32.mrb[0].mxu0
  %121 = vdwg.mxu0
  %v122 = vmax.f32 %v114, 0.0
  %v123 = vmax.f32 %v119, 0.0
  %v124 = vld [vmem:[%s3] sm:$0xff]
  %v125 = vld [vmem:[%s3 + $0x8] sm:$0xff]
  %v126 = vld [vmem:[%s3 + $0x10] sm:$0xff]
  %v127 = vld [vmem:[%s3 + $0x18] sm:$0xff]
  %v128 = vld [vmem:[%s3 + $0x20] sm:$0xff]
  %v129 = vld [vmem:[%s3 + $0x28] sm:$0xff]
  %v130 = vld [vmem:[%s3 + $0x30] sm:$0xff]
  %v131 = vld [vmem:[%s3 + $0x38] sm:$0xff]
  %v132 = vld [vmem:[%s3 + $0x40] sm:$0xff]
  %v133 = vld [vmem:[%s3 + $0x48] sm:$0xff]
  %v134 = vld [vmem:[%s3 + $0x50] sm:$0xff]
  %v135 = vld [vmem:[%s3 + $0x58] sm:$0xff]
  %v136 = vld [vmem:[%s3 + $0x60] sm:$0xff]
  %v137 = vld [vmem:[%s3 + $0x68] sm:$0xff]
  %v138 = vld [vmem:[%s3 + $0x70] sm:$0xff]
  %v139 = vld [vmem:[%s3 + $0x78] sm:$0xff]
  %v140 = vld [vmem:[%s4] sm:$0x1]
  %v142 = vlaneseq
  %v143 = vshrl.u32 %v142, 7
  %v144 = vsub.s32 0, %v143
  %v145 = vrot.slane %v140, %v144
  %147 = vmatprep.subr.mxu0 0.0
  %148 = vmatpush1.msra.mxu0 %v124
  %149 = vmatprep.subr.mxu0 0.0
  %150 = vmatpush1.msra.mxu0 %v125
  %151 = vmatprep.subr.mxu0 0.0
  %152 = vmatpush1.msra.mxu0 %v126
  %153 = vmatprep.subr.mxu0 0.0
  %154 = vmatpush1.msra.mxu0 %v127
  %155 = vmatprep.subr.mxu0 0.0
  %156 = vmatpush1.msra.mxu0 %v128
  %157 = vmatprep.subr.mxu0 0.0
  %158 = vmatpush1.msra.mxu0 %v129
  %159 = vmatprep.subr.mxu0 0.0
  %160 = vmatpush1.msra.mxu0 %v130
  %161 = vmatprep.subr.mxu0 0.0
  %162 = vmatpush1.msra.mxu0 %v131
  %163 = vmatprep.subr.mxu0 0.0
  %164 = vmatpush1.msra.mxu0 %v132
  %165 = vmatprep.subr.mxu0 0.0
  %166 = vmatpush1.msra.mxu0 %v133
  %167 = vmatprep.subr.mxu0 0.0
  %168 = vmatpush1.msra.mxu0 %v134
  %169 = vmatprep.subr.mxu0 0.0
  %170 = vmatpush1.msra.mxu0 %v135
  %171 = vmatprep.subr.mxu0 0.0
  %172 = vmatpush1.msra.mxu0 %v136
  %173 = vmatprep.subr.mxu0 0.0
  %174 = vmatpush1.msra.mxu0 %v137
  %175 = vmatprep.subr.mxu0 0.0
  %176 = vmatpush1.msra.mxu0 %v138
  %177 = vmatprep.subr.mxu0 0.0
  %178 = vmatpush1.msra.mxu0 %v139
  %179 = vmatprep.subr.mxu0 0.0
  %180 = vmatpush1.msra.mxu0 0.0
  %181 = vmatprep.subr.mxu0 0.0
  %182 = vmatpush1.msra.mxu0 0.0
  %183 = vmatprep.subr.mxu0 0.0
  %184 = vmatpush1.msra.mxu0 0.0
  %185 = vmatprep.subr.mxu0 0.0
  %186 = vmatpush1.msra.mxu0 0.0
  %187 = vmatprep.subr.mxu0 0.0
  %188 = vmatpush1.msra.mxu0 0.0
  %189 = vmatprep.subr.mxu0 0.0
  %190 = vmatpush1.msra.mxu0 0.0
  %191 = vmatprep.subr.mxu0 0.0
  %192 = vmatpush1.msra.mxu0 0.0
  %193 = vmatprep.subr.mxu0 0.0
  %194 = vmatpush1.msra.mxu0 0.0
  %195 = vmatprep.subr.mxu0 0.0
  %196 = vmatpush1.msra.mxu0 0.0
  %197 = vmatprep.subr.mxu0 0.0
  %198 = vmatpush1.msra.mxu0 0.0
  %199 = vmatprep.subr.mxu0 0.0
  %200 = vmatpush1.msra.mxu0 0.0
  %201 = vmatprep.subr.mxu0 0.0
  %202 = vmatpush1.msra.mxu0 0.0
  %203 = vmatprep.subr.mxu0 0.0
  %204 = vmatpush1.msra.mxu0 0.0
  %205 = vmatprep.subr.mxu0 0.0
  %206 = vmatpush1.msra.mxu0 0.0
  %207 = vmatprep.subr.mxu0 0.0
  %208 = vmatpush1.msra.mxu0 0.0
  %209 = vmatprep.subr.mxu0 0.0
  %210 = vmatpush1.msra.mxu0 0.0
  %211 = vmatprep.mubr.f32.mxu0 0.0
  %212 = vmatmul.mubr.f32.gmra.mrb[0].mxu0 %v122
  %v213 = vpop.f32.mrb[0].mxu0
  %v214 = vadd.f32 %v145, %v213
  %v215 = vpop.f32.mrb[0].mxu0
  %216 = vmatprep.mubr.f32.mxu0 0.0
  %217 = vmatmul.mubr.f32.gmra.mrb[0].mxu0 %v123
  %v218 = vpop.f32.mrb[0].mxu0
  %v219 = vadd.f32 %v145, %v218
  %v220 = vpop.f32.mrb[0].mxu0
  %221 = vdwg.mxu0
  %v222 = vmul.f32 %v214, %v214
  %v223 = vmul.f32 %v219, %v219
  %226 = vrot.lane.b32.xlu0 %v222, 114
  %v227 = vpop.permute.xlu0 %226
  %228 = vrot.lane.b32.xlu0 %v223, 114
  %v229 = vpop.permute.xlu0 %228
  %v232 = vadd.f32 %v222, %v227
  %v233 = vadd.f32 %v223, %v229
  %234 = vrot.lane.b32.xlu0 %v222, 100
  %v235 = vpop.permute.xlu0 %234
  %236 = vrot.lane.b32.xlu0 %v223, 100
  %v237 = vpop.permute.xlu0 %236
  %v240 = vadd.f32 %v232, %v235
  %v241 = vadd.f32 %v233, %v237
  %v242 = vmax.f32 %v240, 1e-24
  %v243 = vmax.f32 %v241, 1e-24
  %v244 = vrsqrt.pop %v242
  %v245 = vrsqrt.pop %v243
  %v246 = vmul.f32 %v214, %v244
  %v247 = vmul.f32 %v219, %v245
  %250 = vrot.lane.b32.xlu0 %v244, 14
  %v251 = vpop.permute.xlu0 %250
  %252 = vrot.lane.b32.xlu0 %v245, 14
  %v253 = vpop.permute.xlu0 %252
  %v256 = vmul.f32 %v214, %v251
  %v257 = vmul.f32 %v219, %v253
  %258 = vrot.lane.b32.xlu0 %v244, 28
  %v259 = vpop.permute.xlu0 %258
  %260 = vrot.lane.b32.xlu0 %v245, 28
  %v261 = vpop.permute.xlu0 %260
  %v264 = vmul.f32 %v214, %v259
  %v265 = vmul.f32 %v219, %v261
  %268 = vrot.lane.b32.xlu0 %v214, 72
  %v269 = vpop.permute.xlu0 %268
  %270 = vrot.lane.b32.xlu0 %v219, 72
  %v271 = vpop.permute.xlu0 %270
  %v274 = vmul.f32 %v256, %v269
  %v275 = vmul.f32 %v257, %v271
  %276 = vrot.lane.b32.xlu0 %v214, 100
  %v277 = vpop.permute.xlu0 %276
  %278 = vrot.lane.b32.xlu0 %v219, 100
  %v279 = vpop.permute.xlu0 %278
  %v282 = vmul.f32 %v264, %v277
  %v283 = vmul.f32 %v265, %v279
  %286 = vrot.lane.b32.xlu0 %v282, 114
  %v287 = vpop.permute.xlu0 %286
  %288 = vrot.lane.b32.xlu0 %v283, 114
  %v289 = vpop.permute.xlu0 %288
  %v292 = vsub.f32 %v274, %v287
  %v293 = vsub.f32 %v275, %v289
  %294 = vrot.lane.b32.xlu0 %v214, 114
  %v295 = vpop.permute.xlu0 %294
  %296 = vrot.lane.b32.xlu0 %v219, 114
  %v297 = vpop.permute.xlu0 %296
  %v300 = vmul.f32 %v264, %v295
  %v301 = vmul.f32 %v265, %v297
  %302 = vrot.lane.b32.xlu0 %v214, 58
  %v303 = vpop.permute.xlu0 %302
  %304 = vrot.lane.b32.xlu0 %v219, 58
  %v305 = vpop.permute.xlu0 %304
  %v308 = vmul.f32 %v246, %v303
  %v309 = vmul.f32 %v247, %v305
  %312 = vrot.lane.b32.xlu0 %v308, 28
  %v313 = vpop.permute.xlu0 %312
  %314 = vrot.lane.b32.xlu0 %v309, 28
  %v315 = vpop.permute.xlu0 %314
  %v318 = vsub.f32 %v300, %v313
  %v319 = vsub.f32 %v301, %v315
  %v320 = vmul.f32 %v246, %v269
  %v321 = vmul.f32 %v247, %v271
  %v322 = vmul.f32 %v256, %v277
  %v323 = vmul.f32 %v257, %v279
  %326 = vrot.lane.b32.xlu0 %v322, 114
  %v327 = vpop.permute.xlu0 %326
  %328 = vrot.lane.b32.xlu0 %v323, 114
  %v329 = vpop.permute.xlu0 %328
  %v332 = vsub.f32 %v320, %v327
  %v333 = vsub.f32 %v321, %v329
  %v334 = vmul.f32 %v292, %v292
  %v335 = vmul.f32 %v293, %v293
  %v336 = vmul.f32 %v318, %v318
  %v337 = vmul.f32 %v319, %v319
  %340 = vrot.lane.b32.xlu0 %v336, 114
  %v341 = vpop.permute.xlu0 %340
  %342 = vrot.lane.b32.xlu0 %v337, 114
  %v343 = vpop.permute.xlu0 %342
  %v346 = vadd.f32 %v334, %v341
  %v347 = vadd.f32 %v335, %v343
  %v348 = vmul.f32 %v332, %v332
  %v349 = vmul.f32 %v333, %v333
  %352 = vrot.lane.b32.xlu0 %v348, 14
  %v353 = vpop.permute.xlu0 %352
  %354 = vrot.lane.b32.xlu0 %v349, 14
  %v355 = vpop.permute.xlu0 %354
  %v358 = vadd.f32 %v346, %v353
  %v359 = vadd.f32 %v347, %v355
  %v360 = vmax.f32 %v358, 1e-24
  %v361 = vmax.f32 %v359, 1e-24
  %v362 = vrsqrt.pop %v360
  %v363 = vrsqrt.pop %v361
  %v364 = vmul.f32 %v292, %v362
  %v365 = vmul.f32 %v293, %v363
  %368 = vrot.lane.b32.xlu0 %v362, 14
  %v369 = vpop.permute.xlu0 %368
  %370 = vrot.lane.b32.xlu0 %v363, 14
  %v371 = vpop.permute.xlu0 %370
  %v374 = vmul.f32 %v318, %v369
  %v375 = vmul.f32 %v319, %v371
  %376 = vrot.lane.b32.xlu0 %v362, 114
  %v377 = vpop.permute.xlu0 %376
  %378 = vrot.lane.b32.xlu0 %v363, 114
  %v379 = vpop.permute.xlu0 %378
  %v382 = vmul.f32 %v332, %v377
  %v383 = vmul.f32 %v333, %v379
  %v384 = vmul.f32 %v374, %v264
  %v385 = vmul.f32 %v375, %v265
  %388 = vrot.lane.b32.xlu0 %v256, 114
  %v389 = vpop.permute.xlu0 %388
  %390 = vrot.lane.b32.xlu0 %v257, 114
  %v391 = vpop.permute.xlu0 %390
  %v394 = vmul.f32 %v382, %v389
  %v395 = vmul.f32 %v383, %v391
  %398 = vrot.lane.b32.xlu0 %v394, 28
  %v399 = vpop.permute.xlu0 %398
  %400 = vrot.lane.b32.xlu0 %v395, 28
  %v401 = vpop.permute.xlu0 %400
  %v404 = vsub.f32 %v384, %v399
  %v405 = vsub.f32 %v385, %v401
  %v406 = vmul.f32 %v382, %v246
  %v407 = vmul.f32 %v383, %v247
  %410 = vrot.lane.b32.xlu0 %v264, 114
  %v411 = vpop.permute.xlu0 %410
  %412 = vrot.lane.b32.xlu0 %v265, 114
  %v413 = vpop.permute.xlu0 %412
  %v416 = vmul.f32 %v364, %v411
  %v417 = vmul.f32 %v365, %v413
  %420 = vrot.lane.b32.xlu0 %v416, 114
  %v421 = vpop.permute.xlu0 %420
  %422 = vrot.lane.b32.xlu0 %v417, 114
  %v423 = vpop.permute.xlu0 %422
  %v426 = vsub.f32 %v406, %v421
  %v427 = vsub.f32 %v407, %v423
  %v428 = vmul.f32 %v364, %v256
  %v429 = vmul.f32 %v365, %v257
  %432 = vrot.lane.b32.xlu0 %v246, 28
  %v433 = vpop.permute.xlu0 %432
  %434 = vrot.lane.b32.xlu0 %v247, 28
  %v435 = vpop.permute.xlu0 %434
  %v438 = vmul.f32 %v374, %v433
  %v439 = vmul.f32 %v375, %v435
  %442 = vrot.lane.b32.xlu0 %v438, 114
  %v443 = vpop.permute.xlu0 %442
  %444 = vrot.lane.b32.xlu0 %v439, 114
  %v445 = vpop.permute.xlu0 %444
  %v448 = vsub.f32 %v428, %v443
  %v449 = vsub.f32 %v429, %v445
  %452 = vrot.lane.b32.xlu0 %v404, 114
  %v453 = vpop.permute.xlu0 %452
  %454 = vrot.lane.b32.xlu0 %v405, 114
  %v455 = vpop.permute.xlu0 %454
  %460 = vrot.lane.b32.xlu0 %v364, 14
  %v461 = vpop.permute.xlu0 %460
  %462 = vrot.lane.b32.xlu0 %v365, 14
  %v463 = vpop.permute.xlu0 %462
  %466 = vrot.lane.b32.xlu0 %v256, 28
  %v467 = vpop.permute.xlu0 %466
  %468 = vrot.lane.b32.xlu0 %v257, 28
  %v469 = vpop.permute.xlu0 %468
  %474 = vrot.lane.b32.xlu0 %v426, 56
  %v475 = vpop.permute.xlu0 %474
  %476 = vrot.lane.b32.xlu0 %v427, 56
  %v477 = vpop.permute.xlu0 %476
  %482 = vrot.lane.b32.xlu0 %v374, 42
  %v483 = vpop.permute.xlu0 %482
  %484 = vrot.lane.b32.xlu0 %v375, 42
  %v485 = vpop.permute.xlu0 %484
  %488 = vrot.lane.b32.xlu0 %v264, 56
  %v489 = vpop.permute.xlu0 %488
  %490 = vrot.lane.b32.xlu0 %v265, 56
  %v491 = vpop.permute.xlu0 %490
  %496 = vrot.lane.b32.xlu0 %v448, 84
  %v497 = vpop.permute.xlu0 %496
  %498 = vrot.lane.b32.xlu0 %v449, 84
  %v499 = vpop.permute.xlu0 %498
  %504 = vrot.lane.b32.xlu0 %v382, 112
  %v505 = vpop.permute.xlu0 %504
  %506 = vrot.lane.b32.xlu0 %v383, 112
  %v507 = vpop.permute.xlu0 %506
  %vm510 = vcmask 113664
  %v511 = vsel %vm510, %v246, %v453
  %v512 = vsel %vm510, %v247, %v455
  %vm513 = vcmask 228352
  %v514 = vsel %vm513, %v511, %v461
  %v515 = vsel %vm513, %v512, %v463
  %vm516 = vcmask 343040
  %v517 = vsel %vm516, %v514, %v467
  %v518 = vsel %vm516, %v515, %v469
  %vm519 = vcmask 457728
  %v520 = vsel %vm519, %v517, %v475
  %v521 = vsel %vm519, %v518, %v477
  %vm522 = vcmask 572416
  %v523 = vsel %vm522, %v520, %v483
  %v524 = vsel %vm522, %v521, %v485
  %vm525 = vcmask 687104
  %v526 = vsel %vm525, %v523, %v489
  %v527 = vsel %vm525, %v524, %v491
  %vm528 = vcmask 801792
  %v529 = vsel %vm528, %v526, %v497
  %v530 = vsel %vm528, %v527, %v499
  %vm531 = vcmask 916480
  %v532 = vsel %vm531, %v529, %v505
  %v533 = vsel %vm531, %v530, %v507
  %vm534 = vcmask 1031168
  %v535 = vsel %vm534, %v532, 0.0
  %v536 = vsel %vm534, %v533, 0.0
  %537 = vst [vmem:[%s5] sm:$0xff] %v535
  %538 = vst [vmem:[%s5 + $0x8] sm:$0xff] %v536
  %539 = vrot.lane.b32.xlu0 %v214, 44
  %v540 = vpop.permute.xlu0 %539
  %541 = vrot.lane.b32.xlu0 %v219, 44
  %v542 = vpop.permute.xlu0 %541
  %vm545 = vcmask 64512
  %546 = vst.msk [vmem:[%s6] sm:$0xff] %vm545, %v540
  %547 = vst.msk [vmem:[%s6 + $0x8] sm:$0xff] %vm545, %v542
  // Predicated region
  $region22: #{mlp_head_forward.1} parent=0 // pred_check
    _
  $region23: #{mlp_head_forward.1} parent=0 // pred_check_branch
    %549 = sbr.rel (0) target = $region25
  $region24: #{mlp_head_forward.1} parent=0 // pred_region
    _
  $region25: #{mlp_head_forward.1} parent=0 // pred_fallthru
    _
  // Predicated region
  $region26: #{mlp_head_forward.1} parent=0 // pred_check
    _
  $region27: #{mlp_head_forward.1} parent=0 // pred_check_branch
    %551 = sbr.rel (0) target = $region29
  $region28: #{mlp_head_forward.1} parent=0 // pred_region
    _
  $region29: #{mlp_head_forward.1} parent=0 // pred_fallthru
    _
  // Predicated region
  $region30: #{mlp_head_forward.1} parent=0 // pred_check
    _
  $region31: #{mlp_head_forward.1} parent=0 // pred_check_branch
    %553 = sbr.rel (0) target = $region33
  $region32: #{mlp_head_forward.1} parent=0 // pred_region
    _
  $region33: #{mlp_head_forward.1} parent=0 // pred_fallthru
    _
  // Predicated region
  $region34: #{mlp_head_forward.1} parent=0 // pred_check
    _
  $region35: #{mlp_head_forward.1} parent=0 // pred_check_branch
    %555 = sbr.rel (0) target = $region37
  $region36: #{mlp_head_forward.1} parent=0 // pred_region
    _
  $region37: #{mlp_head_forward.1} parent=0 // pred_fallthru
    _

</llo_original>
